<compile_context>
chip_gen: v7x
topology: tpu7x:2x2x1
jax: 0.10.0
libtpu: 0.0.40
codegen_flags: <defaults>
</compile_context>

<pallas_src>
import functools

import numpy as np
import jax
import jax.numpy as jnp
from jax import lax
from jax.experimental import pallas as pl
from jax.experimental.pallas import tpu as pltpu

BN_EPS = 1e-5
_N_VEC_ROWS = 10


def _slab_offsets(C, L, Z):
    """8-row-aligned row offsets of each constant block inside the packed slab."""
    L2 = L // 2

    def up8(n):
        return -(-n // 8) * 8

    r_wenc = 0                       # banded Conv1d weight      (L*C, L2*C)
    r_w1 = r_wenc + up8(L * C)       # encoder Linear weight     (L2*C, 2Z)
    r_w2 = r_w1 + up8(L2 * C)        # decoder Linear weight     (Z, L2*C)
    r_wdec = r_w2 + up8(Z)           # banded ConvT1d weight     (L2*C, L*C)
    r_vec = r_wdec + up8(L2 * C)     # bias / BN-affine rows     (10, lanes)
    total = r_vec + up8(_N_VEC_ROWS)
    return r_wenc, r_w1, r_w2, r_wdec, r_vec, total


def _same_channel_projector(n, C):
    """P[j, j'] = 1.0 iff lanes j and j' hold the same channel (j % C == j' % C)."""
    row = lax.broadcasted_iota(jnp.int32, (n, n), 0)
    col = lax.broadcasted_iota(jnp.int32, (n, n), 1)
    if C & (C - 1) == 0:
        row, col = row & (C - 1), col & (C - 1)
    else:
        row, col = row % C, col % C
    return jnp.where(row == col, 1.0, 0.0).astype(jnp.float32)


def _vae_kernel(x_ref, slab_ref, eps_ref, out_ref, *, C, L, Z):
    L2 = L // 2
    M0 = L * C            # flat input / output width  (128)
    M1 = L2 * C           # "middle" width             (64)
    B = x_ref.shape[0]

    r_wenc, r_w1, r_w2, r_wdec, r_vec, _ = _slab_offsets(C, L, Z)

    x = x_ref[...]                                          # (B, L*C) lane-dense

    # ---- Conv1d(C->C, k=4, s=2, p=1): ONE banded matmul, no taps/reshapes ----
    wenc = slab_ref[r_wenc:r_wenc + M0, 0:M1]               # (L*C, L2*C)
    h = jnp.dot(x, wenc, preferred_element_type=jnp.float32)
    h = h + slab_ref[r_vec + 0:r_vec + 1, 0:M1]             # conv bias (tiled)

    # ---- BatchNorm1d(C) over (batch, length), training-mode batch stats ----
    P1 = _same_channel_projector(M1, C)
    n1 = B * L2
    s1 = jnp.sum(h, axis=0, keepdims=True)                  # (1, M1)
    mean1 = jnp.dot(s1, P1, preferred_element_type=jnp.float32) * (1.0 / n1)
    dev1 = h - mean1
    ssq1 = jnp.sum(dev1 * dev1, axis=0, keepdims=True)
    var1 = jnp.dot(ssq1, P1, preferred_element_type=jnp.float32) * (1.0 / n1)
    h = dev1 * lax.rsqrt(var1 + BN_EPS) * slab_ref[r_vec + 1:r_vec + 2, 0:M1] \
        + slab_ref[r_vec + 2:r_vec + 3, 0:M1]

    # ---- (Flatten already implicit) + merged Linear(middle -> 2z) ----
    w1 = slab_ref[r_w1:r_w1 + M1, 0:2 * Z]
    enc = jnp.dot(h, w1, preferred_element_type=jnp.float32) \
        + slab_ref[r_vec + 3:r_vec + 4, 0:2 * Z]            # (B, 2Z)
    mu = enc[:, 0:Z]
    logvar = enc[:, Z:2 * Z]

    # ---- reparameterize: bn(mu) + eps * exp(logvar) ----
    mean_z = jnp.sum(mu, axis=0, keepdims=True) * (1.0 / B)
    dmu = mu - mean_z
    var_z = jnp.sum(dmu * dmu, axis=0, keepdims=True) * (1.0 / B)
    mu_bn = dmu * lax.rsqrt(var_z + BN_EPS) * slab_ref[r_vec + 4:r_vec + 5, 0:Z] \
        + slab_ref[r_vec + 5:r_vec + 6, 0:Z]
    std = jnp.exp(logvar)
    z_q = mu_bn + eps_ref[...] * std

    # ---- KL (uses pre-BN mu, exactly as in the PyTorch forward) ----
    kl_terms = 0.5 * (mu * mu + std * std - 1.0) - logvar   # (B, Z)
    kl = jnp.sum(jnp.sum(kl_terms, axis=1, keepdims=True), axis=0, keepdims=True)

    # ---- decode: Linear(z -> middle) in [l2-major, c-minor] lane order ----
    w2 = slab_ref[r_w2:r_w2 + Z, 0:M1]
    d = jnp.dot(z_q, w2, preferred_element_type=jnp.float32) \
        + slab_ref[r_vec + 6:r_vec + 7, 0:M1]               # (B, M1)

    # ---- ConvTranspose1d(C->C, k=4, s=2, p=1): ONE banded matmul ----
    wdec = slab_ref[r_wdec:r_wdec + M1, 0:M0]               # (L2*C, L*C)
    y = jnp.dot(d, wdec, preferred_element_type=jnp.float32) \
        + slab_ref[r_vec + 7:r_vec + 8, 0:M0]               # (B, L*C)

    # ---- BatchNorm1d(C) over the full decoded sequence ----
    P2 = _same_channel_projector(M0, C)
    n2 = B * L
    s2 = jnp.sum(y, axis=0, keepdims=True)
    mean2 = jnp.dot(s2, P2, preferred_element_type=jnp.float32) * (1.0 / n2)
    dev2 = y - mean2
    ssq2 = jnp.sum(dev2 * dev2, axis=0, keepdims=True)
    var2 = jnp.dot(ssq2, P2, preferred_element_type=jnp.float32) * (1.0 / n2)
    y_bn = dev2 * lax.rsqrt(var2 + BN_EPS) * slab_ref[r_vec + 8:r_vec + 9, 0:M0] \
        + slab_ref[r_vec + 9:r_vec + 10, 0:M0]

    # ---- single unmasked, tile-aligned store: [activations ; KL broadcast] ----
    pad = out_ref.shape[0] - B
    kl_block = jnp.broadcast_to(kl, (pad, M0))
    out_ref[...] = jnp.concatenate([y_bn, kl_block], axis=0)


def init_params(key, C, L, z_dim):
    middle = C * (L // 2)
    ks = jax.random.split(key, 8)

    def u(k, shape, scale=0.1):
        return jax.random.uniform(k, shape, jnp.float32, -scale, scale)

    return dict(
        conv_w=u(ks[0], (C, C, 4)),                   # Conv1d weight (out, in, k)
        conv_b=u(ks[1], (C,)),
        bn1_g=jnp.ones((C,), jnp.float32),
        bn1_b=jnp.zeros((C,), jnp.float32),
        lin1_w=u(ks[2], (2 * z_dim, middle), 0.05),   # Linear(middle, 2z)
        lin1_b=u(ks[3], (2 * z_dim,), 0.05),
        bnz_g=jnp.ones((z_dim,), jnp.float32),
        bnz_b=jnp.zeros((z_dim,), jnp.float32),
        lin2_w=u(ks[4], (middle, z_dim), 0.05),       # Linear(z, middle)
        lin2_b=u(ks[5], (middle,), 0.05),
        convt_w=u(ks[6], (C, C, 4)),                  # ConvTranspose1d weight (in, out, k)
        convt_b=u(ks[7], (C,)),
        bn2_g=jnp.ones((C,), jnp.float32),
        bn2_b=jnp.zeros((C,), jnp.float32),
    )


def pack_params(params, C, L, Z):
    """One-time host-side repack of all constants into ONE (rows, 128) f32 slab."""
    L2 = L // 2
    M0, M1 = L * C, L2 * C
    lanes = max(M0, 128)
    r_wenc, r_w1, r_w2, r_wdec, r_vec, total = _slab_offsets(C, L, Z)
    slab = np.zeros((total, lanes), np.float32)

    wc = np.asarray(params['conv_w'], np.float32)     # (C, C, 4)  [co, ci, k]
    wt = np.asarray(params['convt_w'], np.float32)    # (C, C, 4)  [ci, co, k]

    # Banded Conv1d / ConvTranspose1d matrices (valid taps: l = 2m - 1 + k).
    for m in range(L2):
        for k in range(4):
            l = 2 * m - 1 + k
            if 0 <= l < L:
                # Conv1d:  h[:, m*C+co] += x[:, l*C+ci] * wc[co, ci, k]
                slab[r_wenc + l * C:r_wenc + (l + 1) * C,
                     m * C:(m + 1) * C] = wc[:, :, k].T
                # ConvT1d: y[:, l*C+co] += d[:, m*C+ci] * wt[ci, co, k]
                slab[r_wdec + m * C:r_wdec + (m + 1) * C,
                     l * C:(l + 1) * C] = wt[:, :, k]

    # Encoder Linear: PyTorch flatten order (c, l2) -> kernel order (l2, c).
    w1 = np.asarray(params['lin1_w'], np.float32).reshape(2 * Z, C, L2)
    slab[r_w1:r_w1 + M1, 0:2 * Z] = w1.transpose(2, 1, 0).reshape(M1, 2 * Z)

    # Decoder Linear (same flatten-order fix), output in [l2-major, c-minor].
    w2 = np.asarray(params['lin2_w'], np.float32).reshape(C, L2, Z)
    slab[r_w2:r_w2 + Z, 0:M1] = w2.transpose(1, 0, 2).reshape(M1, Z).T
    b2 = np.asarray(params['lin2_b'], np.float32).reshape(C, L2).T.reshape(M1)

    vec_rows = [
        np.tile(np.asarray(params['conv_b'], np.float32), L2),   # 0: conv bias   (M1)
        np.tile(np.asarray(params['bn1_g'], np.float32), L2),    # 1: bn1 gamma   (M1)
        np.tile(np.asarray(params['bn1_b'], np.float32), L2),    # 2: bn1 beta    (M1)
        np.asarray(params['lin1_b'], np.float32),                # 3: lin1 bias   (2Z)
        np.asarray(params['bnz_g'], np.float32),                 # 4: bnz gamma   (Z)
        np.asarray(params['bnz_b'], np.float32),                 # 5: bnz beta    (Z)
        b2,                                                      # 6: lin2 bias   (M1)
        np.tile(np.asarray(params['convt_b'], np.float32), L),   # 7: convt bias  (M0)
        np.tile(np.asarray(params['bn2_g'], np.float32), L),     # 8: bn2 gamma   (M0)
        np.tile(np.asarray(params['bn2_b'], np.float32), L),     # 9: bn2 beta    (M0)
    ]
    for i, v in enumerate(vec_rows):
        slab[r_vec + i, :v.shape[0]] = v

    return dict(slab=jnp.asarray(slab))


def vae_forward(x, eps, packed):
    """x: (B, C, L) NCL float32, eps: (B, Z). Returns (out (B, C, L), KL scalar)."""
    B, C, L = x.shape
    Z = eps.shape[1]
    L2 = L // 2
    M0, M1 = L * C, L2 * C
    out_rows = ((B + 1 + 7) // 8) * 8          # activations rows + >=1 KL row, tile-aligned

    # NCL -> flat lane-dense [position-major, channel-minor] slab (B, L*C).
    x_flat = jnp.transpose(x.astype(jnp.float32), (0, 2, 1)).reshape(B, M0)

    flops = 2 * (B * M0 * M1 + 2 * M1 * M1 + B * M1 * (2 * Z)
                 + B * Z * M1 + B * M1 * M0 + 2 * M0 * M0)
    transcendentals = B * Z + M1 + Z + M0
    bytes_accessed = 4 * (x_flat.size + packed['slab'].size + eps.size + out_rows * M0)

    vspec = pl.BlockSpec(memory_space=pltpu.MemorySpace.VMEM)
    res = pl.pallas_call(
        functools.partial(_vae_kernel, C=C, L=L, Z=Z),
        out_shape=jax.ShapeDtypeStruct((out_rows, M0), jnp.float32),
        in_specs=[vspec, vspec, vspec],
        out_specs=vspec,
        cost_estimate=pl.CostEstimate(flops=flops,
                                      transcendentals=transcendentals,
                                      bytes_accessed=bytes_accessed),
    )(x_flat, packed['slab'], eps.astype(jnp.float32))

    out = res[0:B].reshape(B, L, C).transpose(0, 2, 1)     # back to (B, C, L)
    kl = res[B, 0]
    return out, kl


def vae_forward_ref(x, eps, params):
    """Pure-JAX reference (same math, independent conv lowering)."""
    B, C, L = x.shape
    L2 = L // 2
    z_dim = eps.shape[1]

    def bn(h, g, b, axes):
        m = jnp.mean(h, axis=axes, keepdims=True)
        v = jnp.mean((h - m) ** 2, axis=axes, keepdims=True)
        return (h - m) / jnp.sqrt(v + BN_EPS) * g + b

    h = lax.conv_general_dilated(
        x, params['conv_w'], window_strides=(2,), padding=[(1, 1)],
        dimension_numbers=('NCH', 'OIH', 'NCH'),
        precision=lax.Precision.HIGHEST) + params['conv_b'][None, :, None]
    h = bn(h, params['bn1_g'][None, :, None], params['bn1_b'][None, :, None], (0, 2))
    enc = h.reshape(B, C * L2) @ params['lin1_w'].T + params['lin1_b']
    mu, logvar = enc[:, :z_dim], enc[:, z_dim:]
    mu_bn = bn(mu, params['bnz_g'], params['bnz_b'], (0,))
    std = jnp.exp(logvar)
    z_q = mu_bn + eps * std
    kl = jnp.sum(0.5 * (mu ** 2 + std ** 2 - 1.0) - logvar)
    d = (z_q @ params['lin2_w'].T + params['lin2_b']).reshape(B, C, L2)
    wt = jnp.flip(jnp.transpose(params['convt_w'], (1, 0, 2)), axis=2)
    out = lax.conv_general_dilated(
        d, wt, window_strides=(1,), padding=[(2, 2)], lhs_dilation=(2,),
        dimension_numbers=('NCH', 'OIH', 'NCH'),
        precision=lax.Precision.HIGHEST) + params['convt_b'][None, :, None]
    out = bn(out, params['bn2_g'][None, :, None], params['bn2_b'][None, :, None], (0, 2))
    return out, kl


if __name__ == "__main__":
    B, C, L, Z = 4, 8, 16, 8          # num_embeddings=8, embedding_dim=16, z_dim=8
    key = jax.random.PRNGKey(0)
    kx, ke, kp = jax.random.split(key, 3)
    x = jax.random.normal(kx, (B, C, L), jnp.float32)
    # TODO(synk): torch.randn_like eps is generated here with jax.random and fed to the kernel.
    eps = jax.random.normal(ke, (B, Z), jnp.float32)
    params = init_params(kp, C, L, Z)

    # one-time constant repack (hoisted out of the per-call path)
    packed = pack_params(params, C, L, Z)

    fwd = jax.jit(vae_forward)
    out, kl = jax.block_until_ready(fwd(x, eps, packed))

    out_ref, kl_ref = vae_forward_ref(x, eps, params)
    assert out.shape == (B, C, L) and out.dtype == jnp.float32
    assert bool(jnp.all(jnp.isfinite(out))) and bool(jnp.isfinite(kl))
    assert bool(jnp.allclose(out, out_ref, atol=2e-2, rtol=2e-2)), \
        float(jnp.max(jnp.abs(out - out_ref)))
    assert bool(jnp.allclose(kl, kl_ref, atol=2e-2, rtol=2e-2)), (float(kl), float(kl_ref))
    print("KERNEL_OK")
</pallas_src>

<mosaic_0001>
module attributes {stable_mosaic.version = 11 : i64} {
  func.func @_vae_kernel(%arg0: memref<4x128xf32, #tpu.memory_space<vmem>>, %arg1: memref<280x128xf32, #tpu.memory_space<vmem>>, %arg2: memref<4x8xf32, #tpu.memory_space<vmem>>, %arg3: memref<8x128xf32, #tpu.memory_space<vmem>>) attributes {dimension_semantics = [], scalar_prefetch = 0 : i64, scratch_operands = 0 : i64, tpu.core_type = #tpu.core_type<tc>} {
    %c0 = arith.constant 0 : index
    %c0_0 = arith.constant 0 : index
    %0 = vector.load %arg0[%c0, %c0_0] : memref<4x128xf32, #tpu.memory_space<vmem>>, vector<4x128xf32>
    %c0_1 = arith.constant 0 : index
    %c0_2 = arith.constant 0 : index
    %1 = vector.load %arg1[%c0_1, %c0_2] : memref<280x128xf32, #tpu.memory_space<vmem>>, vector<128x64xf32>
    %cst = arith.constant dense<0.000000e+00> : vector<4x64xf32>
    %2 = tpu.matmul %0, %1, %cst {dimension_numbers = #tpu.dot_dimension_numbers<[1], [0], [0], [1], [0, 0, 1, 1], [], []>} : vector<4x128xf32>, vector<128x64xf32>, vector<4x64xf32> -> vector<4x64xf32>
    %c264 = arith.constant 264 : index
    %c0_3 = arith.constant 0 : index
    %3 = vector.load %arg1[%c264, %c0_3] : memref<280x128xf32, #tpu.memory_space<vmem>>, vector<1x64xf32>
    %4 = vector.broadcast %3 : vector<1x64xf32> to vector<4x64xf32>
    %5 = arith.addf %2, %4 : vector<4x64xf32>
    %6 = tpu.iota {dimensions = array<i32: 0>} : vector<64x64xi32>
    %7 = tpu.iota {dimensions = array<i32: 1>} : vector<64x64xi32>
    %c7_i32 = arith.constant 7 : i32
    %8 = vector.broadcast %c7_i32 : i32 to vector<64x64xi32>
    %9 = arith.andi %6, %8 : vector<64x64xi32>
    %c7_i32_4 = arith.constant 7 : i32
    %10 = vector.broadcast %c7_i32_4 : i32 to vector<64x64xi32>
    %11 = arith.andi %7, %10 : vector<64x64xi32>
    %12 = arith.cmpi eq, %9, %11 : vector<64x64xi32>
    %cst_5 = arith.constant 1.000000e+00 : f32
    %cst_6 = arith.constant 0.000000e+00 : f32
    %13 = vector.broadcast %cst_5 : f32 to vector<64x64xf32>
    %14 = vector.broadcast %cst_6 : f32 to vector<64x64xf32>
    %15 = arith.select %12, %13, %14 : vector<64x64xi1>, vector<64x64xf32>
    %cst_7 = arith.constant dense<0.000000e+00> : vector<64xf32>
    %16 = vector.multi_reduction <add>, %5, %cst_7 [0] : vector<4x64xf32> to vector<64xf32>
    %17 = vector.shape_cast %16 : vector<64xf32> to vector<1x64xf32>
    %cst_8 = arith.constant dense<0.000000e+00> : vector<1x64xf32>
    %18 = tpu.matmul %17, %15, %cst_8 {dimension_numbers = #tpu.dot_dimension_numbers<[1], [0], [0], [1], [0, 0, 1, 1], [], []>} : vector<1x64xf32>, vector<64x64xf32>, vector<1x64xf32> -> vector<1x64xf32>
    %cst_9 = arith.constant 3.125000e-02 : f32
    %19 = vector.broadcast %cst_9 : f32 to vector<1x64xf32>
    %20 = arith.mulf %18, %19 : vector<1x64xf32>
    %21 = vector.broadcast %20 : vector<1x64xf32> to vector<4x64xf32>
    %22 = arith.subf %5, %21 : vector<4x64xf32>
    %23 = arith.mulf %22, %22 : vector<4x64xf32>
    %cst_10 = arith.constant dense<0.000000e+00> : vector<64xf32>
    %24 = vector.multi_reduction <add>, %23, %cst_10 [0] : vector<4x64xf32> to vector<64xf32>
    %25 = vector.shape_cast %24 : vector<64xf32> to vector<1x64xf32>
    %cst_11 = arith.constant dense<0.000000e+00> : vector<1x64xf32>
    %26 = tpu.matmul %25, %15, %cst_11 {dimension_numbers = #tpu.dot_dimension_numbers<[1], [0], [0], [1], [0, 0, 1, 1], [], []>} : vector<1x64xf32>, vector<64x64xf32>, vector<1x64xf32> -> vector<1x64xf32>
    %cst_12 = arith.constant 3.125000e-02 : f32
    %27 = vector.broadcast %cst_12 : f32 to vector<1x64xf32>
    %28 = arith.mulf %26, %27 : vector<1x64xf32>
    %cst_13 = arith.constant 9.99999974E-6 : f32
    %29 = vector.broadcast %cst_13 : f32 to vector<1x64xf32>
    %30 = arith.addf %28, %29 : vector<1x64xf32>
    %31 = math.rsqrt %30 : vector<1x64xf32>
    %32 = vector.broadcast %31 : vector<1x64xf32> to vector<4x64xf32>
    %33 = arith.mulf %22, %32 : vector<4x64xf32>
    %c265 = arith.constant 265 : index
    %c0_14 = arith.constant 0 : index
    %34 = vector.load %arg1[%c265, %c0_14] : memref<280x128xf32, #tpu.memory_space<vmem>>, vector<1x64xf32>
    %35 = vector.broadcast %34 : vector<1x64xf32> to vector<4x64xf32>
    %36 = arith.mulf %33, %35 : vector<4x64xf32>
    %c266 = arith.constant 266 : index
    %c0_15 = arith.constant 0 : index
    %37 = vector.load %arg1[%c266, %c0_15] : memref<280x128xf32, #tpu.memory_space<vmem>>, vector<1x64xf32>
    %38 = vector.broadcast %37 : vector<1x64xf32> to vector<4x64xf32>
    %39 = arith.addf %36, %38 : vector<4x64xf32>
    %c128 = arith.constant 128 : index
    %c0_16 = arith.constant 0 : index
    %40 = vector.load %arg1[%c128, %c0_16] : memref<280x128xf32, #tpu.memory_space<vmem>>, vector<64x16xf32>
    %cst_17 = arith.constant dense<0.000000e+00> : vector<4x16xf32>
    %41 = tpu.matmul %39, %40, %cst_17 {dimension_numbers = #tpu.dot_dimension_numbers<[1], [0], [0], [1], [0, 0, 1, 1], [], []>} : vector<4x64xf32>, vector<64x16xf32>, vector<4x16xf32> -> vector<4x16xf32>
    %c267 = arith.constant 267 : index
    %c0_18 = arith.constant 0 : index
    %42 = vector.load %arg1[%c267, %c0_18] : memref<280x128xf32, #tpu.memory_space<vmem>>, vector<1x16xf32>
    %43 = vector.broadcast %42 : vector<1x16xf32> to vector<4x16xf32>
    %44 = arith.addf %41, %43 : vector<4x16xf32>
    %45 = vector.extract_strided_slice %44 {offsets = [0, 0], sizes = [4, 8], strides = [1, 1]} : vector<4x16xf32> to vector<4x8xf32>
    %46 = vector.extract_strided_slice %44 {offsets = [0, 8], sizes = [4, 8], strides = [1, 1]} : vector<4x16xf32> to vector<4x8xf32>
    %cst_19 = arith.constant dense<0.000000e+00> : vector<8xf32>
    %47 = vector.multi_reduction <add>, %45, %cst_19 [0] : vector<4x8xf32> to vector<8xf32>
    %48 = vector.shape_cast %47 : vector<8xf32> to vector<1x8xf32>
    %cst_20 = arith.constant 2.500000e-01 : f32
    %49 = vector.broadcast %cst_20 : f32 to vector<1x8xf32>
    %50 = arith.mulf %48, %49 : vector<1x8xf32>
    %51 = vector.broadcast %50 : vector<1x8xf32> to vector<4x8xf32>
    %52 = arith.subf %45, %51 : vector<4x8xf32>
    %53 = arith.mulf %52, %52 : vector<4x8xf32>
    %cst_21 = arith.constant dense<0.000000e+00> : vector<8xf32>
    %54 = vector.multi_reduction <add>, %53, %cst_21 [0] : vector<4x8xf32> to vector<8xf32>
    %55 = vector.shape_cast %54 : vector<8xf32> to vector<1x8xf32>
    %cst_22 = arith.constant 2.500000e-01 : f32
    %56 = vector.broadcast %cst_22 : f32 to vector<1x8xf32>
    %57 = arith.mulf %55, %56 : vector<1x8xf32>
    %cst_23 = arith.constant 9.99999974E-6 : f32
    %58 = vector.broadcast %cst_23 : f32 to vector<1x8xf32>
    %59 = arith.addf %57, %58 : vector<1x8xf32>
    %60 = math.rsqrt %59 : vector<1x8xf32>
    %61 = vector.broadcast %60 : vector<1x8xf32> to vector<4x8xf32>
    %62 = arith.mulf %52, %61 : vector<4x8xf32>
    %c268 = arith.constant 268 : index
    %c0_24 = arith.constant 0 : index
    %63 = vector.load %arg1[%c268, %c0_24] : memref<280x128xf32, #tpu.memory_space<vmem>>, vector<1x8xf32>
    %64 = vector.broadcast %63 : vector<1x8xf32> to vector<4x8xf32>
    %65 = arith.mulf %62, %64 : vector<4x8xf32>
    %c269 = arith.constant 269 : index
    %c0_25 = arith.constant 0 : index
    %66 = vector.load %arg1[%c269, %c0_25] : memref<280x128xf32, #tpu.memory_space<vmem>>, vector<1x8xf32>
    %67 = vector.broadcast %66 : vector<1x8xf32> to vector<4x8xf32>
    %68 = arith.addf %65, %67 : vector<4x8xf32>
    %69 = math.exp %46 : vector<4x8xf32>
    %c0_26 = arith.constant 0 : index
    %c0_27 = arith.constant 0 : index
    %70 = vector.load %arg2[%c0_26, %c0_27] : memref<4x8xf32, #tpu.memory_space<vmem>>, vector<4x8xf32>
    %71 = arith.mulf %70, %69 : vector<4x8xf32>
    %72 = arith.addf %68, %71 : vector<4x8xf32>
    %73 = arith.mulf %45, %45 : vector<4x8xf32>
    %74 = arith.mulf %69, %69 : vector<4x8xf32>
    %75 = arith.addf %73, %74 : vector<4x8xf32>
    %cst_28 = arith.constant 1.000000e+00 : f32
    %76 = vector.broadcast %cst_28 : f32 to vector<4x8xf32>
    %77 = arith.subf %75, %76 : vector<4x8xf32>
    %cst_29 = arith.constant 5.000000e-01 : f32
    %78 = vector.broadcast %cst_29 : f32 to vector<4x8xf32>
    %79 = arith.mulf %78, %77 : vector<4x8xf32>
    %80 = arith.subf %79, %46 : vector<4x8xf32>
    %cst_30 = arith.constant dense<0.000000e+00> : vector<4xf32>
    %81 = vector.multi_reduction <add>, %80, %cst_30 [1] : vector<4x8xf32> to vector<4xf32>
    %82 = vector.shape_cast %81 : vector<4xf32> to vector<4x1xf32>
    %cst_31 = arith.constant dense<0.000000e+00> : vector<1xf32>
    %83 = vector.multi_reduction <add>, %82, %cst_31 [0] : vector<4x1xf32> to vector<1xf32>
    %84 = vector.shape_cast %83 : vector<1xf32> to vector<1x1xf32>
    %c192 = arith.constant 192 : index
    %c0_32 = arith.constant 0 : index
    %85 = vector.load %arg1[%c192, %c0_32] : memref<280x128xf32, #tpu.memory_space<vmem>>, vector<8x64xf32>
    %cst_33 = arith.constant dense<0.000000e+00> : vector<4x64xf32>
    %86 = tpu.matmul %72, %85, %cst_33 {dimension_numbers = #tpu.dot_dimension_numbers<[1], [0], [0], [1], [0, 0, 1, 1], [], []>} : vector<4x8xf32>, vector<8x64xf32>, vector<4x64xf32> -> vector<4x64xf32>
    %c270 = arith.constant 270 : index
    %c0_34 = arith.constant 0 : index
    %87 = vector.load %arg1[%c270, %c0_34] : memref<280x128xf32, #tpu.memory_space<vmem>>, vector<1x64xf32>
    %88 = vector.broadcast %87 : vector<1x64xf32> to vector<4x64xf32>
    %89 = arith.addf %86, %88 : vector<4x64xf32>
    %c200 = arith.constant 200 : index
    %c0_35 = arith.constant 0 : index
    %90 = vector.load %arg1[%c200, %c0_35] : memref<280x128xf32, #tpu.memory_space<vmem>>, vector<64x128xf32>
    %cst_36 = arith.constant dense<0.000000e+00> : vector<4x128xf32>
    %91 = tpu.matmul %89, %90, %cst_36 {dimension_numbers = #tpu.dot_dimension_numbers<[1], [0], [0], [1], [0, 0, 1, 1], [], []>} : vector<4x64xf32>, vector<64x128xf32>, vector<4x128xf32> -> vector<4x128xf32>
    %c271 = arith.constant 271 : index
    %c0_37 = arith.constant 0 : index
    %92 = vector.load %arg1[%c271, %c0_37] : memref<280x128xf32, #tpu.memory_space<vmem>>, vector<1x128xf32>
    %93 = vector.broadcast %92 : vector<1x128xf32> to vector<4x128xf32>
    %94 = arith.addf %91, %93 : vector<4x128xf32>
    %95 = tpu.iota {dimensions = array<i32: 0>} : vector<128x128xi32>
    %96 = tpu.iota {dimensions = array<i32: 1>} : vector<128x128xi32>
    %c7_i32_38 = arith.constant 7 : i32
    %97 = vector.broadcast %c7_i32_38 : i32 to vector<128x128xi32>
    %98 = arith.andi %95, %97 : vector<128x128xi32>
    %c7_i32_39 = arith.constant 7 : i32
    %99 = vector.broadcast %c7_i32_39 : i32 to vector<128x128xi32>
    %100 = arith.andi %96, %99 : vector<128x128xi32>
    %101 = arith.cmpi eq, %98, %100 : vector<128x128xi32>
    %cst_40 = arith.constant 1.000000e+00 : f32
    %cst_41 = arith.constant 0.000000e+00 : f32
    %102 = vector.broadcast %cst_40 : f32 to vector<128x128xf32>
    %103 = vector.broadcast %cst_41 : f32 to vector<128x128xf32>
    %104 = arith.select %101, %102, %103 : vector<128x128xi1>, vector<128x128xf32>
    %cst_42 = arith.constant dense<0.000000e+00> : vector<128xf32>
    %105 = vector.multi_reduction <add>, %94, %cst_42 [0] : vector<4x128xf32> to vector<128xf32>
    %106 = vector.shape_cast %105 : vector<128xf32> to vector<1x128xf32>
    %cst_43 = arith.constant dense<0.000000e+00> : vector<1x128xf32>
    %107 = tpu.matmul %106, %104, %cst_43 {dimension_numbers = #tpu.dot_dimension_numbers<[1], [0], [0], [1], [0, 0, 1, 1], [], []>} : vector<1x128xf32>, vector<128x128xf32>, vector<1x128xf32> -> vector<1x128xf32>
    %cst_44 = arith.constant 1.562500e-02 : f32
    %108 = vector.broadcast %cst_44 : f32 to vector<1x128xf32>
    %109 = arith.mulf %107, %108 : vector<1x128xf32>
    %110 = vector.broadcast %109 : vector<1x128xf32> to vector<4x128xf32>
    %111 = arith.subf %94, %110 : vector<4x128xf32>
    %112 = arith.mulf %111, %111 : vector<4x128xf32>
    %cst_45 = arith.constant dense<0.000000e+00> : vector<128xf32>
    %113 = vector.multi_reduction <add>, %112, %cst_45 [0] : vector<4x128xf32> to vector<128xf32>
    %114 = vector.shape_cast %113 : vector<128xf32> to vector<1x128xf32>
    %cst_46 = arith.constant dense<0.000000e+00> : vector<1x128xf32>
    %115 = tpu.matmul %114, %104, %cst_46 {dimension_numbers = #tpu.dot_dimension_numbers<[1], [0], [0], [1], [0, 0, 1, 1], [], []>} : vector<1x128xf32>, vector<128x128xf32>, vector<1x128xf32> -> vector<1x128xf32>
    %cst_47 = arith.constant 1.562500e-02 : f32
    %116 = vector.broadcast %cst_47 : f32 to vector<1x128xf32>
    %117 = arith.mulf %115, %116 : vector<1x128xf32>
    %cst_48 = arith.constant 9.99999974E-6 : f32
    %118 = vector.broadcast %cst_48 : f32 to vector<1x128xf32>
    %119 = arith.addf %117, %118 : vector<1x128xf32>
    %120 = math.rsqrt %119 : vector<1x128xf32>
    %121 = vector.broadcast %120 : vector<1x128xf32> to vector<4x128xf32>
    %122 = arith.mulf %111, %121 : vector<4x128xf32>
    %c272 = arith.constant 272 : index
    %c0_49 = arith.constant 0 : index
    %123 = vector.load %arg1[%c272, %c0_49] : memref<280x128xf32, #tpu.memory_space<vmem>>, vector<1x128xf32>
    %124 = vector.broadcast %123 : vector<1x128xf32> to vector<4x128xf32>
    %125 = arith.mulf %122, %124 : vector<4x128xf32>
    %c273 = arith.constant 273 : index
    %c0_50 = arith.constant 0 : index
    %126 = vector.load %arg1[%c273, %c0_50] : memref<280x128xf32, #tpu.memory_space<vmem>>, vector<1x128xf32>
    %127 = vector.broadcast %126 : vector<1x128xf32> to vector<4x128xf32>
    %128 = arith.addf %125, %127 : vector<4x128xf32>
    %129 = vector.shape_cast %84 : vector<1x1xf32> to vector<1x1xf32>
    %130 = vector.broadcast %129 : vector<1x1xf32> to vector<4x128xf32>
    %131 = tpu.concatenate %128, %130 in 0 : vector<4x128xf32>, vector<4x128xf32> -> vector<8x128xf32>
    %c0_51 = arith.constant 0 : index
    %c0_52 = arith.constant 0 : index
    %132 = vector.load %arg3[%c0_51, %c0_52] : memref<8x128xf32, #tpu.memory_space<vmem>>, vector<8x128xf32>
    tpu.vector_store %arg3[%c0_51, %c0_52], %131 {strides = array<i32>} : memref<8x128xf32, #tpu.memory_space<vmem>>, vector<8x128xf32>,
    return
  }
}

</mosaic_0001>

<llo_original>
// kernel: vae_forward.1
$region0: #{vae_forward.1}
  #allocation0 [shape = 'u32[]', space=smem, size = 0x4, offset = 0x4, fixed_abs, tag = 'smem constant byte address 0x4 - core index']
  #allocation1 [shape = 'u32[144,128]{1,0:T(1,128)}', space=vmem, size = 0x12000, scoped, tag = 'internal scratch']
  %s0 = inlined_call_operand.vmem [shape: f32[4,128], index: 0, kind: input, shape index: {}]
  %s1 = inlined_call_operand.hbm [shape: f32[280,128], index: 1, kind: input, shape index: {}]
  %s2 = inlined_call_operand.vmem [shape: f32[4,8], index: 2, kind: input, shape index: {}]
  %s3 = inlined_call_operand.vmem [shape: f32[8,128], index: 3, kind: output, shape index: {}]
  %s4 = sld [smem:[#allocation0]]
  $region26: #{vae_forward.1} parent=0
    _
  %s6 = ssub.s32 1, %s4
  %s7 = scalar_select 0, %s6, %s4
  $region1: #{vae_forward.1} parent=0
    #allocation2 [shape = 'u8[143360]{0}', space=vmem, size = 0x23000, scoped, tag = 'input window, operand 1, single buffered']
    #allocation3 [shape = 's32[1]{0}', space=sflag, size = 0x4, scoped, tag = 'scoped memory for vae_forward.1']
    %8 = vsyncpa [#allocation3], 0
    // Predicated region
    $region2: #{vae_forward.1} parent=1 // pred_check
      _
    $region3: #{vae_forward.1} parent=1 // pred_check_branch
      %10 = sbr.rel (0) target = $region5
    $region4: #{vae_forward.1} parent=1 // pred_region
      _
    $region5: #{vae_forward.1} parent=1 // pred_fallthru
      _
    // Predicated region
    $region6: #{vae_forward.1} parent=1 // pred_check
      _
    $region7: #{vae_forward.1} parent=1 // pred_check_branch
      %12 = sbr.rel (0) target = $region9
    $region8: #{vae_forward.1} parent=1 // pred_region
      %s14 = ssub.s32 4480, 4480
      %15 = vsyncadd [#allocation3], %s14
      %s16 = sshll.u32 [#allocation2], 4
      %s17 = int_to_ptr.vmem [resolvable:$true] %s16
      %22 = dma.hbm_to_vmem [thread:$0]  %s1, 4480, %s17, [#allocation3], 128, 128, 8
    $region9: #{vae_forward.1} parent=1 // pred_fallthru
      _
    // Predicated region
    $region10: #{vae_forward.1} parent=1 // pred_check
      _
    $region11: #{vae_forward.1} parent=1 // pred_check_branch
      %24 = sbr.rel (0) target = $region13
    $region12: #{vae_forward.1} parent=1 // pred_region
      _
    $region13: #{vae_forward.1} parent=1 // pred_fallthru
      _
    // Predicated region
    $region14: #{vae_forward.1} parent=1 // pred_check
      _
    $region15: #{vae_forward.1} parent=1 // pred_check_branch
      %26 = sbr.rel (0) target = $region17
    $region16: #{vae_forward.1} parent=1 // pred_region
      %27 = dma.done [#allocation3], 4480
    $region17: #{vae_forward.1} parent=1 // pred_fallthru
      _
    %v28 = vld [vmem:[%s0] sm:$0xf]
    %v29 = vld [vmem:[#allocation2] sm:$0xff]
    %v30 = vld [vmem:[#allocation2 + $0x8] sm:$0xff]
    %v31 = vld [vmem:[#allocation2 + $0x10] sm:$0xff]
    %v32 = vld [vmem:[#allocation2 + $0x18] sm:$0xff]
    %v33 = vld [vmem:[#allocation2 + $0x20] sm:$0xff]
    %v34 = vld [vmem:[#allocation2 + $0x28] sm:$0xff]
    %v35 = vld [vmem:[#allocation2 + $0x30] sm:$0xff]
    %v36 = vld [vmem:[#allocation2 + $0x38] sm:$0xff]
    %v37 = vld [vmem:[#allocation2 + $0x40] sm:$0xff]
    %v38 = vld [vmem:[#allocation2 + $0x48] sm:$0xff]
    %v39 = vld [vmem:[#allocation2 + $0x50] sm:$0xff]
    %v40 = vld [vmem:[#allocation2 + $0x58] sm:$0xff]
    %v41 = vld [vmem:[#allocation2 + $0x60] sm:$0xff]
    %v42 = vld [vmem:[#allocation2 + $0x68] sm:$0xff]
    %v43 = vld [vmem:[#allocation2 + $0x70] sm:$0xff]
    %v44 = vld [vmem:[#allocation2 + $0x78] sm:$0xff]
    %v45 = vld [vmem:[#allocation2 + $0x108] sm:$0x1]
    %v46 = vlaneseq
    %v47 = vshrl.u32 %v46, 7
    %v48 = vsub.s32 0, %v47
    %v49 = vrot.slane %v45, %v48
    %50 = vmatprep.subr.mxu0 0.0
    %51 = vmatpush1.msra.mxu0 %v29
    %52 = vmatprep.subr.mxu0 0.0
    %53 = vmatpush1.msra.mxu0 %v30
    %54 = vmatprep.subr.mxu0 0.0
    %55 = vmatpush1.msra.mxu0 %v31
    %56 = vmatprep.subr.mxu0 0.0
    %57 = vmatpush1.msra.mxu0 %v32
    %58 = vmatprep.subr.mxu0 0.0
    %59 = vmatpush1.msra.mxu0 %v33
    %60 = vmatprep.subr.mxu0 0.0
    %61 = vmatpush1.msra.mxu0 %v34
    %62 = vmatprep.subr.mxu0 0.0
    %63 = vmatpush1.msra.mxu0 %v35
    %64 = vmatprep.subr.mxu0 0.0
    %65 = vmatpush1.msra.mxu0 %v36
    %66 = vmatprep.subr.mxu0 0.0
    %67 = vmatpush1.msra.mxu0 %v37
    %68 = vmatprep.subr.mxu0 0.0
    %69 = vmatpush1.msra.mxu0 %v38
    %70 = vmatprep.subr.mxu0 0.0
    %71 = vmatpush1.msra.mxu0 %v39
    %72 = vmatprep.subr.mxu0 0.0
    %73 = vmatpush1.msra.mxu0 %v40
    %74 = vmatprep.subr.mxu0 0.0
    %75 = vmatpush1.msra.mxu0 %v41
    %76 = vmatprep.subr.mxu0 0.0
    %77 = vmatpush1.msra.mxu0 %v42
    %78 = vmatprep.subr.mxu0 0.0
    %79 = vmatpush1.msra.mxu0 %v43
    %80 = vmatprep.subr.mxu0 0.0
    %81 = vmatpush1.msra.mxu0 %v44
    %82 = vmatprep.subr.mxu0 0.0
    %83 = vmatpush1.msra.mxu0 0.0
    %84 = vmatprep.subr.mxu0 0.0
    %85 = vmatpush1.msra.mxu0 0.0
    %86 = vmatprep.subr.mxu0 0.0
    %87 = vmatpush1.msra.mxu0 0.0
    %88 = vmatprep.subr.mxu0 0.0
    %89 = vmatpush1.msra.mxu0 0.0
    %90 = vmatprep.subr.mxu0 0.0
    %91 = vmatpush1.msra.mxu0 0.0
    %92 = vmatprep.subr.mxu0 0.0
    %93 = vmatpush1.msra.mxu0 0.0
    %94 = vmatprep.subr.mxu0 0.0
    %95 = vmatpush1.msra.mxu0 0.0
    %96 = vmatprep.subr.mxu0 0.0
    %97 = vmatpush1.msra.mxu0 0.0
    %98 = vmatprep.subr.mxu0 0.0
    %99 = vmatpush1.msra.mxu0 0.0
    %100 = vmatprep.subr.mxu0 0.0
    %101 = vmatpush1.msra.mxu0 0.0
    %102 = vmatprep.subr.mxu0 0.0
    %103 = vmatpush1.msra.mxu0 0.0
    %104 = vmatprep.subr.mxu0 0.0
    %105 = vmatpush1.msra.mxu0 0.0
    %106 = vmatprep.subr.mxu0 0.0
    %107 = vmatpush1.msra.mxu0 0.0
    %108 = vmatprep.subr.mxu0 0.0
    %109 = vmatpush1.msra.mxu0 0.0
    %110 = vmatprep.subr.mxu0 0.0
    %111 = vmatpush1.msra.mxu0 0.0
    %112 = vmatprep.subr.mxu0 0.0
    %113 = vmatpush1.msra.mxu0 0.0
    %114 = vmatprep.mubr.f32.mxu0 0.0
    %115 = vmatmul.mubr.f32.gmra.mrb[0].mxu0 %v28
    %v116 = vpop.f32.mrb[0].mxu0
    %v117 = vadd.f32 %v49, %v116
    %v118 = vpop.f32.mrb[0].mxu0
    %119 = vdwg.mxu0
    %v120 = vlaneseq
    %v121 = vshrl.u32 %v120, 7
    %v122 = vadd.s32 %v121, 8
    %v123 = vadd.s32 %v121, 16
    %v124 = vadd.s32 %v121, 24
    %v125 = vadd.s32 %v121, 32
    %v126 = vadd.s32 %v121, 40
    %v127 = vadd.s32 %v121, 48
    %v128 = vadd.s32 %v121, 56
    %v129 = vlaneseq
    %v130 = vand.u32 %v129, 127
    %v131 = vand.u32 %v121, 7
    %v132 = vand.u32 %v122, 7
    %v133 = vand.u32 %v123, 7
    %v134 = vand.u32 %v124, 7
    %v135 = vand.u32 %v125, 7
    %v136 = vand.u32 %v126, 7
    %v137 = vand.u32 %v127, 7
    %v138 = vand.u32 %v128, 7
    %v139 = vand.u32 %v130, 7
    %vm140 = vcmp.eq.s32.totalorder %v131, %v139
    %vm141 = vcmp.eq.s32.totalorder %v132, %v139
    %vm142 = vcmp.eq.s32.totalorder %v133, %v139
    %vm143 = vcmp.eq.s32.totalorder %v134, %v139
    %vm144 = vcmp.eq.s32.totalorder %v135, %v139
    %vm145 = vcmp.eq.s32.totalorder %v136, %v139
    %vm146 = vcmp.eq.s32.totalorder %v137, %v139
    %vm147 = vcmp.eq.s32.totalorder %v138, %v139
    %v148 = vsel %vm140, 1.0, 0.0
    %v149 = vsel %vm141, 1.0, 0.0
    %v150 = vsel %vm142, 1.0, 0.0
    %v151 = vsel %vm143, 1.0, 0.0
    %v152 = vsel %vm144, 1.0, 0.0
    %v153 = vsel %vm145, 1.0, 0.0
    %v154 = vsel %vm146, 1.0, 0.0
    %v155 = vsel %vm147, 1.0, 0.0
    %vm156 = vcmask 519168
    %v157 = vsel %vm156, %v117, 0.0
    %v158 = vrot.slane %v157, 4
    %v159 = vadd.f32 %v157, %v158
    %v160 = vrot.slane %v159, 2
    %v161 = vadd.f32 %v159, %v160
    %v162 = vrot.slane %v161, 1
    %v163 = vadd.f32 %v161, %v162
    %vm164 = vcmask 523264
    %v166 = vsel %vm164, %v163, 0
    %168 = vmatprep.subr.mxu0 0.0
    %169 = vmatpush1.msra.mxu0 %v148
    %170 = vmatprep.subr.mxu0 0.0
    %171 = vmatpush1.msra.mxu0 %v149
    %172 = vmatprep.subr.mxu0 0.0
    %173 = vmatpush1.msra.mxu0 %v150
    %174 = vmatprep.subr.mxu0 0.0
    %175 = vmatpush1.msra.mxu0 %v151
    %176 = vmatprep.subr.mxu0 0.0
    %177 = vmatpush1.msra.mxu0 %v152
    %178 = vmatprep.subr.mxu0 0.0
    %179 = vmatpush1.msra.mxu0 %v153
    %180 = vmatprep.subr.mxu0 0.0
    %181 = vmatpush1.msra.mxu0 %v154
    %182 = vmatprep.subr.mxu0 0.0
    %183 = vmatpush1.msra.mxu0 %v155
    %184 = vmatprep.subr.mxu0 0.0
    %185 = vmatpush1.msra.mxu0 0.0
    %186 = vmatprep.subr.mxu0 0.0
    %187 = vmatpush1.msra.mxu0 0.0
    %188 = vmatprep.subr.mxu0 0.0
    %189 = vmatpush1.msra.mxu0 0.0
    %190 = vmatprep.subr.mxu0 0.0
    %191 = vmatpush1.msra.mxu0 0.0
    %192 = vmatprep.subr.mxu0 0.0
    %193 = vmatpush1.msra.mxu0 0.0
    %194 = vmatprep.subr.mxu0 0.0
    %195 = vmatpush1.msra.mxu0 0.0
    %196 = vmatprep.subr.mxu0 0.0
    %197 = vmatpush1.msra.mxu0 0.0
    %198 = vmatprep.subr.mxu0 0.0
    %199 = vmatpush1.msra.mxu0 0.0
    %200 = vmatprep.subr.mxu0 0.0
    %201 = vmatpush1.msra.mxu0 0.0
    %202 = vmatprep.subr.mxu0 0.0
    %203 = vmatpush1.msra.mxu0 0.0
    %204 = vmatprep.subr.mxu0 0.0
    %205 = vmatpush1.msra.mxu0 0.0
    %206 = vmatprep.subr.mxu0 0.0
    %207 = vmatpush1.msra.mxu0 0.0
    %208 = vmatprep.subr.mxu0 0.0
    %209 = vmatpush1.msra.mxu0 0.0
    %210 = vmatprep.subr.mxu0 0.0
    %211 = vmatpush1.msra.mxu0 0.0
    %212 = vmatprep.subr.mxu0 0.0
    %213 = vmatpush1.msra.mxu0 0.0
    %214 = vmatprep.subr.mxu0 0.0
    %215 = vmatpush1.msra.mxu0 0.0
    %216 = vmatprep.subr.mxu0 0.0
    %217 = vmatpush1.msra.mxu0 0.0
    %218 = vmatprep.subr.mxu0 0.0
    %219 = vmatpush1.msra.mxu0 0.0
    %220 = vmatprep.subr.mxu0 0.0
    %221 = vmatpush1.msra.mxu0 0.0
    %222 = vmatprep.subr.mxu0 0.0
    %223 = vmatpush1.msra.mxu0 0.0
    %224 = vmatprep.subr.mxu0 0.0
    %225 = vmatpush1.msra.mxu0 0.0
    %226 = vmatprep.subr.mxu0 0.0
    %227 = vmatpush1.msra.mxu0 0.0
    %228 = vmatprep.subr.mxu0 0.0
    %229 = vmatpush1.msra.mxu0 0.0
    %230 = vmatprep.subr.mxu0 0.0
    %231 = vmatpush1.msra.mxu0 0.0
    %232 = vmatprep.mubr.f32.mxu0 0.0
    %233 = vmatmul.mubr.f32.gmra.mrb[0].mxu0 %v166
    %v234 = vpop.f32.mrb[0].mxu0
    %v235 = vadd.f32 0.0, %v234
    %v236 = vpop.f32.mrb[0].mxu0
    %237 = vdwg.mxu0
    %v238 = vmul.f32 %v235, 0.03125
    %v239 = vlaneseq
    %v240 = vshrl.u32 %v239, 7
    %v241 = vsub.s32 0, %v240
    %v242 = vrot.slane %v238, %v241
    %v243 = vsub.f32 %v117, %v242
    %v244 = vmul.f32 %v243, %v243
    %v245 = vsel %vm156, %v244, 0.0
    %v246 = vrot.slane %v245, 4
    %v247 = vadd.f32 %v245, %v246
    %v248 = vrot.slane %v247, 2
    %v249 = vadd.f32 %v247, %v248
    %v250 = vrot.slane %v249, 1
    %v251 = vadd.f32 %v249, %v250
    %v253 = vsel %vm164, %v251, 0
    %255 = vmatprep.subr.mxu0 0.0
    %256 = vmatpush1.msra.mxu0 %v148
    %257 = vmatprep.subr.mxu0 0.0
    %258 = vmatpush1.msra.mxu0 %v149
    %259 = vmatprep.subr.mxu0 0.0
    %260 = vmatpush1.msra.mxu0 %v150
    %261 = vmatprep.subr.mxu0 0.0
    %262 = vmatpush1.msra.mxu0 %v151
    %263 = vmatprep.subr.mxu0 0.0
    %264 = vmatpush1.msra.mxu0 %v152
    %265 = vmatprep.subr.mxu0 0.0
    %266 = vmatpush1.msra.mxu0 %v153
    %267 = vmatprep.subr.mxu0 0.0
    %268 = vmatpush1.msra.mxu0 %v154
    %269 = vmatprep.subr.mxu0 0.0
    %270 = vmatpush1.msra.mxu0 %v155
    %271 = vmatprep.subr.mxu0 0.0
    %272 = vmatpush1.msra.mxu0 0.0
    %273 = vmatprep.subr.mxu0 0.0
    %274 = vmatpush1.msra.mxu0 0.0
    %275 = vmatprep.subr.mxu0 0.0
    %276 = vmatpush1.msra.mxu0 0.0
    %277 = vmatprep.subr.mxu0 0.0
    %278 = vmatpush1.msra.mxu0 0.0
    %279 = vmatprep.subr.mxu0 0.0
    %280 = vmatpush1.msra.mxu0 0.0
    %281 = vmatprep.subr.mxu0 0.0
    %282 = vmatpush1.msra.mxu0 0.0
    %283 = vmatprep.subr.mxu0 0.0
    %284 = vmatpush1.msra.mxu0 0.0
    %285 = vmatprep.subr.mxu0 0.0
    %286 = vmatpush1.msra.mxu0 0.0
    %287 = vmatprep.subr.mxu0 0.0
    %288 = vmatpush1.msra.mxu0 0.0
    %289 = vmatprep.subr.mxu0 0.0
    %290 = vmatpush1.msra.mxu0 0.0
    %291 = vmatprep.subr.mxu0 0.0
    %292 = vmatpush1.msra.mxu0 0.0
    %293 = vmatprep.subr.mxu0 0.0
    %294 = vmatpush1.msra.mxu0 0.0
    %295 = vmatprep.subr.mxu0 0.0
    %296 = vmatpush1.msra.mxu0 0.0
    %297 = vmatprep.subr.mxu0 0.0
    %298 = vmatpush1.msra.mxu0 0.0
    %299 = vmatprep.subr.mxu0 0.0
    %300 = vmatpush1.msra.mxu0 0.0
    %301 = vmatprep.subr.mxu0 0.0
    %302 = vmatpush1.msra.mxu0 0.0
    %303 = vmatprep.subr.mxu0 0.0
    %304 = vmatpush1.msra.mxu0 0.0
    %305 = vmatprep.subr.mxu0 0.0
    %306 = vmatpush1.msra.mxu0 0.0
    %307 = vmatprep.subr.mxu0 0.0
    %308 = vmatpush1.msra.mxu0 0.0
    %309 = vmatprep.subr.mxu0 0.0
    %310 = vmatpush1.msra.mxu0 0.0
    %311 = vmatprep.subr.mxu0 0.0
    %312 = vmatpush1.msra.mxu0 0.0
    %313 = vmatprep.subr.mxu0 0.0
    %314 = vmatpush1.msra.mxu0 0.0
    %315 = vmatprep.subr.mxu0 0.0
    %316 = vmatpush1.msra.mxu0 0.0
    %317 = vmatprep.subr.mxu0 0.0
    %318 = vmatpush1.msra.mxu0 0.0
    %319 = vmatprep.mubr.f32.mxu0 0.0
    %320 = vmatmul.mubr.f32.gmra.mrb[0].mxu0 %v253
    %v321 = vpop.f32.mrb[0].mxu0
    %v322 = vadd.f32 0.0, %v321
    %v323 = vpop.f32.mrb[0].mxu0
    %324 = vdwg.mxu0
    %v325 = vmul.f32 %v322, 0.03125
    %v326 = vadd.f32 %v325, 1e-05
    %v327 = vrsqrt.pop %v326
    %v328 = vlaneseq
    %v329 = vshrl.u32 %v328, 7
    %v330 = vsub.s32 0, %v329
    %v331 = vrot.slane %v327, %v330
    %v332 = vmul.f32 %v243, %v331
    %v333 = vld [vmem:[#allocation2 + $0x109] sm:$0x1]
    %v334 = vlaneseq
    %v335 = vshrl.u32 %v334, 7
    %v336 = vsub.s32 0, %v335
    %v337 = vrot.slane %v333, %v336
    %v338 = vmul.f32 %v332, %v337
    %v339 = vld [vmem:[#allocation2 + $0x10a] sm:$0x1]
    %v340 = vlaneseq
    %v341 = vshrl.u32 %v340, 7
    %v342 = vsub.s32 0, %v341
    %v343 = vrot.slane %v339, %v342
    %v344 = vadd.f32 %v338, %v343
    %v345 = vld [vmem:[#allocation2 + $0x80] sm:$0xff]
    %v346 = vld [vmem:[#allocation2 + $0x88] sm:$0xff]
    %v347 = vld [vmem:[#allocation2 + $0x90] sm:$0xff]
    %v348 = vld [vmem:[#allocation2 + $0x98] sm:$0xff]
    %v349 = vld [vmem:[#allocation2 + $0xa0] sm:$0xff]
    %v350 = vld [vmem:[#allocation2 + $0xa8] sm:$0xff]
    %v351 = vld [vmem:[#allocation2 + $0xb0] sm:$0xff]
    %v352 = vld [vmem:[#allocation2 + $0xb8] sm:$0xff]
    %v353 = vld [vmem:[#allocation2 + $0x10b] sm:$0x1]
    %v354 = vlaneseq
    %v355 = vshrl.u32 %v354, 7
    %v356 = vsub.s32 0, %v355
    %v357 = vrot.slane %v353, %v356
    %v359 = vsel %vm164, %v344, 0
    %361 = vmatprep.subr.mxu0 0.0
    %362 = vmatpush1.msra.mxu0 %v345
    %363 = vmatprep.subr.mxu0 0.0
    %364 = vmatpush1.msra.mxu0 %v346
    %365 = vmatprep.subr.mxu0 0.0
    %366 = vmatpush1.msra.mxu0 %v347
    %367 = vmatprep.subr.mxu0 0.0
    %368 = vmatpush1.msra.mxu0 %v348
    %369 = vmatprep.subr.mxu0 0.0
    %370 = vmatpush1.msra.mxu0 %v349
    %371 = vmatprep.subr.mxu0 0.0
    %372 = vmatpush1.msra.mxu0 %v350
    %373 = vmatprep.subr.mxu0 0.0
    %374 = vmatpush1.msra.mxu0 %v351
    %375 = vmatprep.subr.mxu0 0.0
    %376 = vmatpush1.msra.mxu0 %v352
    %377 = vmatprep.subr.mxu0 0.0
    %378 = vmatpush1.msra.mxu0 0.0
    %379 = vmatprep.subr.mxu0 0.0
    %380 = vmatpush1.msra.mxu0 0.0
    %381 = vmatprep.subr.mxu0 0.0
    %382 = vmatpush1.msra.mxu0 0.0
    %383 = vmatprep.subr.mxu0 0.0
    %384 = vmatpush1.msra.mxu0 0.0
    %385 = vmatprep.subr.mxu0 0.0
    %386 = vmatpush1.msra.mxu0 0.0
    %387 = vmatprep.subr.mxu0 0.0
    %388 = vmatpush1.msra.mxu0 0.0
    %389 = vmatprep.subr.mxu0 0.0
    %390 = vmatpush1.msra.mxu0 0.0
    %391 = vmatprep.subr.mxu0 0.0
    %392 = vmatpush1.msra.mxu0 0.0
    %393 = vmatprep.subr.mxu0 0.0
    %394 = vmatpush1.msra.mxu0 0.0
    %395 = vmatprep.subr.mxu0 0.0
    %396 = vmatpush1.msra.mxu0 0.0
    %397 = vmatprep.subr.mxu0 0.0
    %398 = vmatpush1.msra.mxu0 0.0
    %399 = vmatprep.subr.mxu0 0.0
    %400 = vmatpush1.msra.mxu0 0.0
    %401 = vmatprep.subr.mxu0 0.0
    %402 = vmatpush1.msra.mxu0 0.0
    %403 = vmatprep.subr.mxu0 0.0
    %404 = vmatpush1.msra.mxu0 0.0
    %405 = vmatprep.subr.mxu0 0.0
    %406 = vmatpush1.msra.mxu0 0.0
    %407 = vmatprep.subr.mxu0 0.0
    %408 = vmatpush1.msra.mxu0 0.0
    %409 = vmatprep.subr.mxu0 0.0
    %410 = vmatpush1.msra.mxu0 0.0
    %411 = vmatprep.subr.mxu0 0.0
    %412 = vmatpush1.msra.mxu0 0.0
    %413 = vmatprep.subr.mxu0 0.0
    %414 = vmatpush1.msra.mxu0 0.0
    %415 = vmatprep.subr.mxu0 0.0
    %416 = vmatpush1.msra.mxu0 0.0
    %417 = vmatprep.subr.mxu0 0.0
    %418 = vmatpush1.msra.mxu0 0.0
    %419 = vmatprep.subr.mxu0 0.0
    %420 = vmatpush1.msra.mxu0 0.0
    %421 = vmatprep.subr.mxu0 0.0
    %422 = vmatpush1.msra.mxu0 0.0
    %423 = vmatprep.subr.mxu0 0.0
    %424 = vmatpush1.msra.mxu0 0.0
    %425 = vmatprep.mubr.f32.mxu0 0.0
    %426 = vmatmul.mubr.f32.gmra.mrb[0].mxu0 %v359
    %v427 = vpop.f32.mrb[0].mxu0
    %v428 = vadd.f32 %v357, %v427
    %v429 = vpop.f32.mrb[0].mxu0
    %430 = vdwg.mxu0
    %vm431 = vcmask 60416
    %v432 = vsel %vm431, %v428, 0.0
    %v433 = vrot.slane %v432, 4
    %v434 = vadd.f32 %v432, %v433
    %v435 = vrot.slane %v434, 2
    %v436 = vadd.f32 %v434, %v435
    %v437 = vrot.slane %v436, 1
    %v438 = vadd.f32 %v436, %v437
    %v439 = vmul.f32 %v438, 0.25
    %v440 = vsub.f32 %v428, %v439
    %v441 = vmul.f32 %v440, %v440
    %v442 = vsel %vm431, %v441, 0.0
    %v443 = vrot.slane %v442, 4
    %v444 = vadd.f32 %v442, %v443
    %v445 = vrot.slane %v444, 2
    %v446 = vadd.f32 %v444, %v445
    %v447 = vrot.slane %v446, 1
    %v448 = vadd.f32 %v446, %v447
    %v449 = vmul.f32 %v448, 0.25
    %v450 = vadd.f32 %v449, 1e-05
    %v451 = vrsqrt.pop %v450
    %v452 = vmul.f32 %v440, %v451
    %v453 = vld [vmem:[#allocation2 + $0x10c] sm:$0x1]
    %v454 = vlaneseq
    %v455 = vshrl.u32 %v454, 7
    %v456 = vsub.s32 0, %v455
    %v457 = vrot.slane %v453, %v456
    %v458 = vmul.f32 %v452, %v457
    %v459 = vld [vmem:[#allocation2 + $0x10d] sm:$0x1]
    %v460 = vlaneseq
    %v461 = vshrl.u32 %v460, 7
    %v462 = vsub.s32 0, %v461
    %v463 = vrot.slane %v459, %v462
    %v464 = vadd.f32 %v458, %v463
    %v465 = vmul.f32 %v428, 1.442695
    %v466 = vpow.pop %v465
    %v467 = vld [vmem:[%s2] sm:$0xf]
    %469 = vrot.lane.b32.xlu0 %v466, 120
    %v470 = vpop.permute.xlu0 %469
    %v472 = vmul.f32 %v467, %v470
    %v473 = vadd.f32 %v464, %v472
    %v474 = vmul.f32 %v428, %v428
    %v475 = vmul.f32 %v466, %v466
    %477 = vrot.lane.b32.xlu0 %v475, 120
    %v478 = vpop.permute.xlu0 %477
    %v480 = vadd.f32 %v474, %v478
    %v481 = vsub.f32 %v480, 1.0
    %v482 = vmul.f32 %v481, 0.5
    %484 = vrot.lane.b32.xlu0 %v428, 120
    %v485 = vpop.permute.xlu0 %484
    %v487 = vsub.f32 %v482, %v485
    %v488 = vsel %vm431, %v487, 0.0
    %489 = vadd.xlane.f32.xlu0 %v488
    %v490 = vpop.xlane.xlu0 %489
    %vm491 = vcmask 1043456
    %v492 = vsel %vm491, %v490, 0.0
    %v493 = vrot.slane %v492, 4
    %v494 = vadd.f32 %v492, %v493
    %v495 = vrot.slane %v494, 2
    %v496 = vadd.f32 %v494, %v495
    %v497 = vrot.slane %v496, 1
    %v498 = vadd.f32 %v496, %v497
    %v499 = vld [vmem:[#allocation2 + $0xc0] sm:$0xff]
    %v500 = vld [vmem:[#allocation2 + $0x10e] sm:$0x1]
    %v501 = vlaneseq
    %v502 = vshrl.u32 %v501, 7
    %v503 = vsub.s32 0, %v502
    %v504 = vrot.slane %v500, %v503
    %vm505 = vcmask 64512
    %v507 = vsel %vm505, %v473, 0
    %509 = vmatprep.subr.mxu0 0.0
    %510 = vmatpush1.msra.mxu0 %v499
    %511 = vmatprep.subr.mxu0 0.0
    %512 = vmatpush1.msra.mxu0 0.0
    %513 = vmatprep.subr.mxu0 0.0
    %514 = vmatpush1.msra.mxu0 0.0
    %515 = vmatprep.subr.mxu0 0.0
    %516 = vmatpush1.msra.mxu0 0.0
    %517 = vmatprep.subr.mxu0 0.0
    %518 = vmatpush1.msra.mxu0 0.0
    %519 = vmatprep.subr.mxu0 0.0
    %520 = vmatpush1.msra.mxu0 0.0
    %521 = vmatprep.subr.mxu0 0.0
    %522 = vmatpush1.msra.mxu0 0.0
    %523 = vmatprep.subr.mxu0 0.0
    %524 = vmatpush1.msra.mxu0 0.0
    %525 = vmatprep.subr.mxu0 0.0
    %526 = vmatpush1.msra.mxu0 0.0
    %527 = vmatprep.subr.mxu0 0.0
    %528 = vmatpush1.msra.mxu0 0.0
    %529 = vmatprep.subr.mxu0 0.0
    %530 = vmatpush1.msra.mxu0 0.0
    %531 = vmatprep.subr.mxu0 0.0
    %532 = vmatpush1.msra.mxu0 0.0
    %533 = vmatprep.subr.mxu0 0.0
    %534 = vmatpush1.msra.mxu0 0.0
    %535 = vmatprep.subr.mxu0 0.0
    %536 = vmatpush1.msra.mxu0 0.0
    %537 = vmatprep.subr.mxu0 0.0
    %538 = vmatpush1.msra.mxu0 0.0
    %539 = vmatprep.subr.mxu0 0.0
    %540 = vmatpush1.msra.mxu0 0.0
    %541 = vmatprep.subr.mxu0 0.0
    %542 = vmatpush1.msra.mxu0 0.0
    %543 = vmatprep.subr.mxu0 0.0
    %544 = vmatpush1.msra.mxu0 0.0
    %545 = vmatprep.subr.mxu0 0.0
    %546 = vmatpush1.msra.mxu0 0.0
    %547 = vmatprep.subr.mxu0 0.0
    %548 = vmatpush1.msra.mxu0 0.0
    %549 = vmatprep.subr.mxu0 0.0
    %550 = vmatpush1.msra.mxu0 0.0
    %551 = vmatprep.subr.mxu0 0.0
    %552 = vmatpush1.msra.mxu0 0.0
    %553 = vmatprep.subr.mxu0 0.0
    %554 = vmatpush1.msra.mxu0 0.0
    %555 = vmatprep.subr.mxu0 0.0
    %556 = vmatpush1.msra.mxu0 0.0
    %557 = vmatprep.subr.mxu0 0.0
    %558 = vmatpush1.msra.mxu0 0.0
    %559 = vmatprep.subr.mxu0 0.0
    %560 = vmatpush1.msra.mxu0 0.0
    %561 = vmatprep.subr.mxu0 0.0
    %562 = vmatpush1.msra.mxu0 0.0
    %563 = vmatprep.subr.mxu0 0.0
    %564 = vmatpush1.msra.mxu0 0.0
    %565 = vmatprep.subr.mxu0 0.0
    %566 = vmatpush1.msra.mxu0 0.0
    %567 = vmatprep.subr.mxu0 0.0
    %568 = vmatpush1.msra.mxu0 0.0
    %569 = vmatprep.subr.mxu0 0.0
    %570 = vmatpush1.msra.mxu0 0.0
    %571 = vmatprep.subr.mxu0 0.0
    %572 = vmatpush1.msra.mxu0 0.0
    %573 = vmatprep.mubr.f32.mxu0 0.0
    %574 = vmatmul.mubr.f32.gmra.mrb[0].mxu0 %v507
    %v575 = vpop.f32.mrb[0].mxu0
    %v576 = vadd.f32 %v504, %v575
    %v577 = vpop.f32.mrb[0].mxu0
    %578 = vdwg.mxu0
    %v579 = vld [vmem:[#allocation2 + $0xc8] sm:$0xff]
    %v580 = vld [vmem:[#allocation2 + $0xd0] sm:$0xff]
    %v581 = vld [vmem:[#allocation2 + $0xd8] sm:$0xff]
    %v582 = vld [vmem:[#allocation2 + $0xe0] sm:$0xff]
    %v583 = vld [vmem:[#allocation2 + $0xe8] sm:$0xff]
    %v584 = vld [vmem:[#allocation2 + $0xf0] sm:$0xff]
    %v585 = vld [vmem:[#allocation2 + $0xf8] sm:$0xff]
    %v586 = vld [vmem:[#allocation2 + $0x100] sm:$0xff]
    %v587 = vld [vmem:[#allocation2 + $0x10f] sm:$0x1]
    %v588 = vlaneseq
    %v589 = vshrl.u32 %v588, 7
    %v590 = vsub.s32 0, %v589
    %v591 = vrot.slane %v587, %v590
    %v593 = vsel %vm164, %v576, 0
    %595 = vmatprep.subr.mxu0 0.0
    %596 = vmatpush1.msra.mxu0 %v579
    %597 = vmatprep.subr.mxu0 0.0
    %598 = vmatpush1.msra.mxu0 %v580
    %599 = vmatprep.subr.mxu0 0.0
    %600 = vmatpush1.msra.mxu0 %v581
    %601 = vmatprep.subr.mxu0 0.0
    %602 = vmatpush1.msra.mxu0 %v582
    %603 = vmatprep.subr.mxu0 0.0
    %604 = vmatpush1.msra.mxu0 %v583
    %605 = vmatprep.subr.mxu0 0.0
    %606 = vmatpush1.msra.mxu0 %v584
    %607 = vmatprep.subr.mxu0 0.0
    %608 = vmatpush1.msra.mxu0 %v585
    %609 = vmatprep.subr.mxu0 0.0
    %610 = vmatpush1.msra.mxu0 %v586
    %611 = vmatprep.subr.mxu0 0.0
    %612 = vmatpush1.msra.mxu0 0.0
    %613 = vmatprep.subr.mxu0 0.0
    %614 = vmatpush1.msra.mxu0 0.0
    %615 = vmatprep.subr.mxu0 0.0
    %616 = vmatpush1.msra.mxu0 0.0
    %617 = vmatprep.subr.mxu0 0.0
    %618 = vmatpush1.msra.mxu0 0.0
    %619 = vmatprep.subr.mxu0 0.0
    %620 = vmatpush1.msra.mxu0 0.0
    %621 = vmatprep.subr.mxu0 0.0
    %622 = vmatpush1.msra.mxu0 0.0
    %623 = vmatprep.subr.mxu0 0.0
    %624 = vmatpush1.msra.mxu0 0.0
    %625 = vmatprep.subr.mxu0 0.0
    %626 = vmatpush1.msra.mxu0 0.0
    %627 = vmatprep.subr.mxu0 0.0
    %628 = vmatpush1.msra.mxu0 0.0
    %629 = vmatprep.subr.mxu0 0.0
    %630 = vmatpush1.msra.mxu0 0.0
    %631 = vmatprep.subr.mxu0 0.0
    %632 = vmatpush1.msra.mxu0 0.0
    %633 = vmatprep.subr.mxu0 0.0
    %634 = vmatpush1.msra.mxu0 0.0
    %635 = vmatprep.subr.mxu0 0.0
    %636 = vmatpush1.msra.mxu0 0.0
    %637 = vmatprep.subr.mxu0 0.0
    %638 = vmatpush1.msra.mxu0 0.0
    %639 = vmatprep.subr.mxu0 0.0
    %640 = vmatpush1.msra.mxu0 0.0
    %641 = vmatprep.subr.mxu0 0.0
    %642 = vmatpush1.msra.mxu0 0.0
    %643 = vmatprep.subr.mxu0 0.0
    %644 = vmatpush1.msra.mxu0 0.0
    %645 = vmatprep.subr.mxu0 0.0
    %646 = vmatpush1.msra.mxu0 0.0
    %647 = vmatprep.subr.mxu0 0.0
    %648 = vmatpush1.msra.mxu0 0.0
    %649 = vmatprep.subr.mxu0 0.0
    %650 = vmatpush1.msra.mxu0 0.0
    %651 = vmatprep.subr.mxu0 0.0
    %652 = vmatpush1.msra.mxu0 0.0
    %653 = vmatprep.subr.mxu0 0.0
    %654 = vmatpush1.msra.mxu0 0.0
    %655 = vmatprep.subr.mxu0 0.0
    %656 = vmatpush1.msra.mxu0 0.0
    %657 = vmatprep.subr.mxu0 0.0
    %658 = vmatpush1.msra.mxu0 0.0
    %659 = vmatprep.mubr.f32.mxu0 0.0
    %660 = vmatmul.mubr.f32.gmra.mrb[0].mxu0 %v593
    %v661 = vpop.f32.mrb[0].mxu0
    %v662 = vadd.f32 %v591, %v661
    %v663 = vpop.f32.mrb[0].mxu0
    %664 = vdwg.mxu0
    %v665 = vadd.s32 %v121, 64
    %v666 = vadd.s32 %v121, 72
    %v667 = vadd.s32 %v121, 80
    %v668 = vadd.s32 %v121, 88
    %v669 = vadd.s32 %v121, 96
    %v670 = vadd.s32 %v121, 104
    %v671 = vadd.s32 %v121, 112
    %v672 = vadd.s32 %v121, 120
    %v673 = vand.u32 %v665, 7
    %v674 = vand.u32 %v666, 7
    %v675 = vand.u32 %v667, 7
    %v676 = vand.u32 %v668, 7
    %v677 = vand.u32 %v669, 7
    %v678 = vand.u32 %v670, 7
    %v679 = vand.u32 %v671, 7
    %v680 = vand.u32 %v672, 7
    %vm681 = vcmp.eq.s32.totalorder %v673, %v139
    %vm682 = vcmp.eq.s32.totalorder %v674, %v139
    %vm683 = vcmp.eq.s32.totalorder %v675, %v139
    %vm684 = vcmp.eq.s32.totalorder %v676, %v139
    %vm685 = vcmp.eq.s32.totalorder %v677, %v139
    %vm686 = vcmp.eq.s32.totalorder %v678, %v139
    %vm687 = vcmp.eq.s32.totalorder %v679, %v139
    %vm688 = vcmp.eq.s32.totalorder %v680, %v139
    %v689 = vsel %vm681, 1.0, 0.0
    %v690 = vsel %vm682, 1.0, 0.0
    %v691 = vsel %vm683, 1.0, 0.0
    %v692 = vsel %vm684, 1.0, 0.0
    %v693 = vsel %vm685, 1.0, 0.0
    %v694 = vsel %vm686, 1.0, 0.0
    %v695 = vsel %vm687, 1.0, 0.0
    %v696 = vsel %vm688, 1.0, 0.0
    %v697 = vsel %vm491, %v662, 0.0
    %v698 = vrot.slane %v697, 4
    %v699 = vadd.f32 %v697, %v698
    %v700 = vrot.slane %v699, 2
    %v701 = vadd.f32 %v699, %v700
    %v702 = vrot.slane %v701, 1
    %v703 = vadd.f32 %v701, %v702
    %704 = vmatprep.subr.mxu0 0.0
    %705 = vmatpush1.msra.mxu0 %v148
    %706 = vmatprep.subr.mxu0 0.0
    %707 = vmatpush1.msra.mxu0 %v149
    %708 = vmatprep.subr.mxu0 0.0
    %709 = vmatpush1.msra.mxu0 %v150
    %710 = vmatprep.subr.mxu0 0.0
    %711 = vmatpush1.msra.mxu0 %v151
    %712 = vmatprep.subr.mxu0 0.0
    %713 = vmatpush1.msra.mxu0 %v152
    %714 = vmatprep.subr.mxu0 0.0
    %715 = vmatpush1.msra.mxu0 %v153
    %716 = vmatprep.subr.mxu0 0.0
    %717 = vmatpush1.msra.mxu0 %v154
    %718 = vmatprep.subr.mxu0 0.0
    %719 = vmatpush1.msra.mxu0 %v155
    %720 = vmatprep.subr.mxu0 0.0
    %721 = vmatpush1.msra.mxu0 %v689
    %722 = vmatprep.subr.mxu0 0.0
    %723 = vmatpush1.msra.mxu0 %v690
    %724 = vmatprep.subr.mxu0 0.0
    %725 = vmatpush1.msra.mxu0 %v691
    %726 = vmatprep.subr.mxu0 0.0
    %727 = vmatpush1.msra.mxu0 %v692
    %728 = vmatprep.subr.mxu0 0.0
    %729 = vmatpush1.msra.mxu0 %v693
    %730 = vmatprep.subr.mxu0 0.0
    %731 = vmatpush1.msra.mxu0 %v694
    %732 = vmatprep.subr.mxu0 0.0
    %733 = vmatpush1.msra.mxu0 %v695
    %734 = vmatprep.subr.mxu0 0.0
    %735 = vmatpush1.msra.mxu0 %v696
    %736 = vmatprep.subr.mxu0 0.0
    %737 = vmatpush1.msra.mxu0 0.0
    %738 = vmatprep.subr.mxu0 0.0
    %739 = vmatpush1.msra.mxu0 0.0
    %740 = vmatprep.subr.mxu0 0.0
    %741 = vmatpush1.msra.mxu0 0.0
    %742 = vmatprep.subr.mxu0 0.0
    %743 = vmatpush1.msra.mxu0 0.0
    %744 = vmatprep.subr.mxu0 0.0
    %745 = vmatpush1.msra.mxu0 0.0
    %746 = vmatprep.subr.mxu0 0.0
    %747 = vmatpush1.msra.mxu0 0.0
    %748 = vmatprep.subr.mxu0 0.0
    %749 = vmatpush1.msra.mxu0 0.0
    %750 = vmatprep.subr.mxu0 0.0
    %751 = vmatpush1.msra.mxu0 0.0
    %752 = vmatprep.subr.mxu0 0.0
    %753 = vmatpush1.msra.mxu0 0.0
    %754 = vmatprep.subr.mxu0 0.0
    %755 = vmatpush1.msra.mxu0 0.0
    %756 = vmatprep.subr.mxu0 0.0
    %757 = vmatpush1.msra.mxu0 0.0
    %758 = vmatprep.subr.mxu0 0.0
    %759 = vmatpush1.msra.mxu0 0.0
    %760 = vmatprep.subr.mxu0 0.0
    %761 = vmatpush1.msra.mxu0 0.0
    %762 = vmatprep.subr.mxu0 0.0
    %763 = vmatpush1.msra.mxu0 0.0
    %764 = vmatprep.subr.mxu0 0.0
    %765 = vmatpush1.msra.mxu0 0.0
    %766 = vmatprep.subr.mxu0 0.0
    %767 = vmatpush1.msra.mxu0 0.0
    %768 = vmatprep.mubr.f32.mxu0 0.0
    %769 = vmatmul.mubr.f32.gmra.mrb[0].mxu0 %v703
    %v770 = vpop.f32.mrb[0].mxu0
    %v771 = vadd.f32 0.0, %v770
    %v772 = vpop.f32.mrb[0].mxu0
    %773 = vdwg.mxu0
    %v774 = vmul.f32 %v771, 0.015625
    %v775 = vlaneseq
    %v776 = vshrl.u32 %v775, 7
    %v777 = vsub.s32 0, %v776
    %v778 = vrot.slane %v774, %v777
    %v779 = vsub.f32 %v662, %v778
    %v780 = vmul.f32 %v779, %v779
    %v781 = vsel %vm491, %v780, 0.0
    %v782 = vrot.slane %v781, 4
    %v783 = vadd.f32 %v781, %v782
    %v784 = vrot.slane %v783, 2
    %v785 = vadd.f32 %v783, %v784
    %v786 = vrot.slane %v785, 1
    %v787 = vadd.f32 %v785, %v786
    %788 = vmatprep.subr.mxu0 0.0
    %789 = vmatpush1.msra.mxu0 %v148
    %790 = vmatprep.subr.mxu0 0.0
    %791 = vmatpush1.msra.mxu0 %v149
    %792 = vmatprep.subr.mxu0 0.0
    %793 = vmatpush1.msra.mxu0 %v150
    %794 = vmatprep.subr.mxu0 0.0
    %795 = vmatpush1.msra.mxu0 %v151
    %796 = vmatprep.subr.mxu0 0.0
    %797 = vmatpush1.msra.mxu0 %v152
    %798 = vmatprep.subr.mxu0 0.0
    %799 = vmatpush1.msra.mxu0 %v153
    %800 = vmatprep.subr.mxu0 0.0
    %801 = vmatpush1.msra.mxu0 %v154
    %802 = vmatprep.subr.mxu0 0.0
    %803 = vmatpush1.msra.mxu0 %v155
    %804 = vmatprep.subr.mxu0 0.0
    %805 = vmatpush1.msra.mxu0 %v689
    %806 = vmatprep.subr.mxu0 0.0
    %807 = vmatpush1.msra.mxu0 %v690
    %808 = vmatprep.subr.mxu0 0.0
    %809 = vmatpush1.msra.mxu0 %v691
    %810 = vmatprep.subr.mxu0 0.0
    %811 = vmatpush1.msra.mxu0 %v692
    %812 = vmatprep.subr.mxu0 0.0
    %813 = vmatpush1.msra.mxu0 %v693
    %814 = vmatprep.subr.mxu0 0.0
    %815 = vmatpush1.msra.mxu0 %v694
    %816 = vmatprep.subr.mxu0 0.0
    %817 = vmatpush1.msra.mxu0 %v695
    %818 = vmatprep.subr.mxu0 0.0
    %819 = vmatpush1.msra.mxu0 %v696
    %820 = vmatprep.subr.mxu0 0.0
    %821 = vmatpush1.msra.mxu0 0.0
    %822 = vmatprep.subr.mxu0 0.0
    %823 = vmatpush1.msra.mxu0 0.0
    %824 = vmatprep.subr.mxu0 0.0
    %825 = vmatpush1.msra.mxu0 0.0
    %826 = vmatprep.subr.mxu0 0.0
    %827 = vmatpush1.msra.mxu0 0.0
    %828 = vmatprep.subr.mxu0 0.0
    %829 = vmatpush1.msra.mxu0 0.0
    %830 = vmatprep.subr.mxu0 0.0
    %831 = vmatpush1.msra.mxu0 0.0
    %832 = vmatprep.subr.mxu0 0.0
    %833 = vmatpush1.msra.mxu0 0.0
    %834 = vmatprep.subr.mxu0 0.0
    %835 = vmatpush1.msra.mxu0 0.0
    %836 = vmatprep.subr.mxu0 0.0
    %837 = vmatpush1.msra.mxu0 0.0
    %838 = vmatprep.subr.mxu0 0.0
    %839 = vmatpush1.msra.mxu0 0.0
    %840 = vmatprep.subr.mxu0 0.0
    %841 = vmatpush1.msra.mxu0 0.0
    %842 = vmatprep.subr.mxu0 0.0
    %843 = vmatpush1.msra.mxu0 0.0
    %844 = vmatprep.subr.mxu0 0.0
    %845 = vmatpush1.msra.mxu0 0.0
    %846 = vmatprep.subr.mxu0 0.0
    %847 = vmatpush1.msra.mxu0 0.0
    %848 = vmatprep.subr.mxu0 0.0
    %849 = vmatpush1.msra.mxu0 0.0
    %850 = vmatprep.subr.mxu0 0.0
    %851 = vmatpush1.msra.mxu0 0.0
    %852 = vmatprep.mubr.f32.mxu0 0.0
    %853 = vmatmul.mubr.f32.gmra.mrb[0].mxu0 %v787
    %v854 = vpop.f32.mrb[0].mxu0
    %v855 = vadd.f32 0.0, %v854
    %v856 = vpop.f32.mrb[0].mxu0
    %857 = vdwg.mxu0
    %v858 = vmul.f32 %v855, 0.015625
    %v859 = vadd.f32 %v858, 1e-05
    %v860 = vrsqrt.pop %v859
    %v861 = vlaneseq
    %v862 = vshrl.u32 %v861, 7
    %v863 = vsub.s32 0, %v862
    %v864 = vrot.slane %v860, %v863
    %v865 = vmul.f32 %v779, %v864
    %v866 = vld [vmem:[#allocation2 + $0x110] sm:$0x1]
    %v867 = vlaneseq
    %v868 = vshrl.u32 %v867, 7
    %v869 = vsub.s32 0, %v868
    %v870 = vrot.slane %v866, %v869
    %v871 = vmul.f32 %v865, %v870
    %v872 = vld [vmem:[#allocation2 + $0x111] sm:$0x1]
    %v873 = vlaneseq
    %v874 = vshrl.u32 %v873, 7
    %v875 = vsub.s32 0, %v874
    %v876 = vrot.slane %v872, %v875
    %v877 = vadd.f32 %v871, %v876
    %v878 = vsel %vm491, %v877, %v498
    %879 = vst [vmem:[%s3] sm:$0xff] %v878
    // Predicated region
    $region18: #{vae_forward.1} parent=1 // pred_check
      _
    $region19: #{vae_forward.1} parent=1 // pred_check_branch
      %881 = sbr.rel (0) target = $region21
    $region20: #{vae_forward.1} parent=1 // pred_region
      _
    $region21: #{vae_forward.1} parent=1 // pred_fallthru
      _
    // Predicated region
    $region22: #{vae_forward.1} parent=1 // pred_check
      _
    $region23: #{vae_forward.1} parent=1 // pred_check_branch
      %883 = sbr.rel (0) target = $region25
    $region24: #{vae_forward.1} parent=1 // pred_region
      _
    $region25: #{vae_forward.1} parent=1 // pred_fallthru
      _
    %884 = vsyncpa [#allocation3], 1

</llo_original>
